<compile_context>
chip_gen: v7x
topology: tpu7x:2x2x1
jax: 0.10.0
libtpu: 0.0.40
codegen_flags: <defaults>
</compile_context>

<pallas_src>
import functools

import jax
import jax.numpy as jnp
from jax.experimental import pallas as pl
from jax.experimental.pallas import tpu as pltpu


def _round_up(x, m):
    return ((x + m - 1) // m) * m


def _router_kernel(x_ref, w_ref, b_ref,
                   probs_ref, topv_ref, topi_ref, stats_ref,
                   *, num_selected_experts, num_experts, e_pad,
                   tile_t, tokens_actual):
    """Fused MoE router tile.

    x_ref     : [TILE_T, H]  token tile (natural layout)
    w_ref     : [E, H]       router weight (grid-resident)
    b_ref     : [E, 1]       router bias
    probs_ref : [E, TILE_T]  softmax probabilities (token on lane axis)
    topv_ref  : [K, TILE_T]  top-k combine weights (token on lane axis)
    topi_ref  : [K, TILE_T]  top-k expert indices, int32 (token on lane axis)
    stats_ref : [E_pad, 2]   per-tile partials: col 0 = tokens-per-expert,
                             col 1 (row 0) = sum(logits**2) over valid tokens
    """
    tile_idx = pl.program_id(0)

    x = x_ref[...]
    w = w_ref[...]

    # logits_T[E, TILE_T] = W[E, H] @ x[TILE_T, H]^T  (rhs-transposed MXU matmul)
    logits = jax.lax.dot_general(
        w, x, dimension_numbers=(((1,), (1,)), ((), ())),
        preferred_element_type=jnp.float32)
    logits = logits + b_ref[...].astype(jnp.float32)           # [E, TILE_T]

    # validity mask for padded token lanes of this tile
    lane = jax.lax.broadcasted_iota(jnp.int32, (1, tile_t), 1)
    valid_f = ((tile_idx * tile_t + lane) < tokens_actual).astype(jnp.float32)

    # router z-loss partial: sum(logits**2) over valid tokens
    zsq = logits * logits * valid_f
    zsum = jnp.sum(jnp.sum(zsq, axis=1, keepdims=True), axis=0, keepdims=True)

    # softmax over the expert (sublane) axis
    m = jnp.max(logits, axis=0, keepdims=True)                 # [1, TILE_T]
    e = jnp.exp(logits - m)
    denom = jnp.sum(e, axis=0, keepdims=True)
    probs = e * pl.reciprocal(denom, approx=False)             # [E, TILE_T]
    probs_ref[...] = probs

    # iterative top-k: unrolled VALU max/argmax tree over the static expert axis
    row_ids = jax.lax.broadcasted_iota(jnp.int32, (e_pad, tile_t), 0)
    work = probs
    cnt_mask = jnp.zeros((e_pad, tile_t), jnp.float32)
    vals, idxs = [], []
    for _ in range(num_selected_experts):
        best_v = work[0:1, :]
        best_i = jnp.zeros((1, tile_t), jnp.int32)
        for eidx in range(1, num_experts):
            v = work[eidx:eidx + 1, :]
            better = v > best_v          # strict > keeps lowest index on ties
            best_v = jnp.where(better, v, best_v)
            best_i = jnp.where(better, eidx, best_i)
        vals.append(best_v)
        idxs.append(best_i)
        sel_pad = row_ids == best_i                            # [E_pad, TILE_T]
        cnt_mask = cnt_mask + sel_pad.astype(jnp.float32)
        # probs >= 0, so -1 masks the chosen expert out of later rounds
        work = jnp.where(sel_pad[:num_experts, :], -1.0, work)

    topv_ref[...] = jnp.concatenate(vals, axis=0)              # [K, TILE_T]
    topi_ref[...] = jnp.concatenate(idxs, axis=0)              # [K, TILE_T]

    # per-tile partial stats (reduced in the wrapper -> grid stays parallel)
    counts = jnp.sum(cnt_mask * valid_f, axis=1, keepdims=True)  # [E_pad, 1]
    stats_ref[:, 0:1] = counts
    row0 = jax.lax.broadcasted_iota(jnp.int32, (e_pad, 1), 0)
    stats_ref[:, 1:2] = jnp.where(row0 == 0, zsum, 0.0)


def tokens_choose_scatter_router(token_inputs, weight, bias,
                                 num_selected_experts, expert_capacity):
    """Forward pass of TokensChooseScatterRouter (jitter_noise = 0)."""
    # TODO(synk): expert_capacity-based truncation and jitter_noise > 0 are not
    # used by the reference forward (capacity is never read, jitter defaults to
    # 0.0), so they are intentionally not implemented here.
    del expert_capacity
    num_groups, tokens_per_group, hidden_dim = token_inputs.shape
    num_experts = weight.shape[0]
    t = num_groups * tokens_per_group
    k = num_selected_experts
    e_pad = max(8, _round_up(num_experts, 8))

    x = token_inputs.reshape(t, hidden_dim)          # keep original dtype
    w = weight.astype(x.dtype)                       # [E, H]
    b2 = bias.reshape(num_experts, 1).astype(jnp.float32)

    # --- tile sizing: lane-aligned token tiles, VMEM-budget aware ------------
    itemsize = jnp.dtype(x.dtype).itemsize
    bytes_per_row = max(hidden_dim * itemsize, 1)
    # keep each (double-buffered) x tile <= ~8 MiB so it fits comfortably on
    # v5e/v6e/v7x; never below one 128-lane tile.
    cap = max(128, min(1024, ((8 * 1024 * 1024) // bytes_per_row) // 128 * 128))
    t128 = _round_up(t, 128)
    tile_t = min(cap, t128)
    t_pad = _round_up(t, tile_t)
    num_tiles = t_pad // tile_t

    if t_pad != t:
        x = jnp.pad(x, ((0, t_pad - t), (0, 0)))

    kernel = functools.partial(
        _router_kernel,
        num_selected_experts=k, num_experts=num_experts, e_pad=e_pad,
        tile_t=tile_t, tokens_actual=t)

    probs_t, topv_t, topi_t, stats = pl.pallas_call(
        kernel,
        grid=(num_tiles,),
        out_shape=(
            jax.ShapeDtypeStruct((num_experts, t_pad), jnp.float32),  # probs^T
            jax.ShapeDtypeStruct((k, t_pad), jnp.float32),            # topv^T
            jax.ShapeDtypeStruct((k, t_pad), jnp.int32),              # topi^T
            jax.ShapeDtypeStruct((num_tiles * e_pad, 2), jnp.float32),  # partials
        ),
        in_specs=[
            pl.BlockSpec((tile_t, hidden_dim), lambda i: (i, 0)),
            pl.BlockSpec((num_experts, hidden_dim), lambda i: (0, 0)),  # resident
            pl.BlockSpec((num_experts, 1), lambda i: (0, 0)),           # resident
        ],
        out_specs=(
            pl.BlockSpec((num_experts, tile_t), lambda i: (0, i)),
            pl.BlockSpec((k, tile_t), lambda i: (0, i)),
            pl.BlockSpec((k, tile_t), lambda i: (0, i)),
            pl.BlockSpec((e_pad, 2), lambda i: (i, 0)),
        ),
        compiler_params=pltpu.CompilerParams(
            dimension_semantics=("parallel",),
            vmem_limit_bytes=48 * 1024 * 1024),
    )(x, w, b2)

    # un-pad + transpose back to token-major layout (cheap: E/K-wide arrays)
    router_probs = probs_t[:, :t].T.reshape(num_groups, tokens_per_group,
                                            num_experts)
    combine_weights = topv_t[:, :t].T.reshape(num_groups, tokens_per_group, k)
    expert_indices = topi_t[:, :t].T.reshape(num_groups, tokens_per_group, k)

    # reduce per-tile partials
    stats = stats.reshape(num_tiles, e_pad, 2)
    tpe = jnp.sum(stats[:, :num_experts, 0], axis=0)   # tokens per expert [E]
    zsum = jnp.sum(stats[:, 0, 1])                     # sum(logits**2)

    # load-balancing auxiliary loss (matches the module's definition)
    total_tokens = jnp.sum(tpe)
    auxiliary_loss = jnp.mean((tpe - total_tokens / num_experts) ** 2)

    # router z-loss (mean of logits**2)
    router_z_loss = zsum / (t * num_experts)

    # dispatch indices: [num_groups, tokens_per_group, K, 2] = (flat_token, expert)
    # NOTE: int32 (JAX default) instead of torch's int64.
    batch_indices = jnp.repeat(jnp.arange(t, dtype=jnp.int32), k)
    dispatch_indices = jnp.stack(
        [batch_indices, expert_indices.reshape(-1)], axis=1)
    dispatch_indices = dispatch_indices.reshape(num_groups, tokens_per_group,
                                                k, 2)

    return dict(dispatch_indices=dispatch_indices,
                combine_weights=combine_weights,
                auxiliary_loss=auxiliary_loss,
                router_z_loss=router_z_loss,
                router_probs=router_probs)


def _reference(token_inputs, weight, bias, k):
    """Pure-JAX reference of the same forward, for validation."""
    g, tg, h = token_inputs.shape
    e = weight.shape[0]
    logits = jnp.einsum('gth,eh->gte', token_inputs, weight,
                        precision=jax.lax.Precision.HIGHEST) + bias
    probs = jax.nn.softmax(logits, axis=-1)
    cw, idx = jax.lax.top_k(probs, k)
    mask = jax.nn.one_hot(idx, e).sum(axis=2)
    tpe = mask.sum(axis=(0, 1))
    aux = jnp.mean((tpe - tpe.sum() / e) ** 2)
    z = jnp.mean(logits ** 2)
    return probs, cw, idx, aux, z


if __name__ == "__main__":
    num_groups, tokens_per_group, hidden_dim = 2, 8, 32
    num_experts, num_selected_experts = 8, 2
    expert_capacity = 4

    key = jax.random.PRNGKey(0)
    k_x, k_w = jax.random.split(key)
    token_inputs = jax.random.normal(
        k_x, (num_groups, tokens_per_group, hidden_dim), dtype=jnp.float32)
    # RouterWeights: weight [num_experts, hidden_dim] ~ N(0, 0.02), bias zeros
    weight = 0.02 * jax.random.normal(
        k_w, (num_experts, hidden_dim), dtype=jnp.float32)
    bias = jnp.zeros((num_experts,), dtype=jnp.float32)

    out = tokens_choose_scatter_router(token_inputs, weight, bias,
                                       num_selected_experts, expert_capacity)
    jax.block_until_ready(out)

    # quick correctness check vs. pure-JAX reference
    probs_ref, cw_ref, idx_ref, aux_ref, z_ref = _reference(
        token_inputs, weight, bias, num_selected_experts)
    assert jnp.allclose(out["router_probs"], probs_ref, atol=1e-5)
    assert jnp.allclose(out["combine_weights"], cw_ref, atol=1e-5)
    assert jnp.array_equal(out["dispatch_indices"][..., 1],
                           idx_ref.astype(jnp.int32))
    assert jnp.allclose(out["auxiliary_loss"], aux_ref, atol=1e-4)
    assert jnp.allclose(out["router_z_loss"], z_ref, atol=1e-6)

    print("KERNEL_OK")
</pallas_src>

<mosaic_0001>
module attributes {stable_mosaic.version = 11 : i64} {
  func.func @_router_kernel(%arg0: i32, %arg1: memref<128x32xf32, #tpu.memory_space<vmem>>, %arg2: memref<8x32xf32, #tpu.memory_space<vmem>>, %arg3: memref<8x1xf32, #tpu.memory_space<vmem>>, %arg4: memref<8x128xf32, #tpu.memory_space<vmem>>, %arg5: memref<2x128xf32, #tpu.memory_space<vmem>>, %arg6: memref<2x128xi32, #tpu.memory_space<vmem>>, %arg7: memref<8x2xf32, #tpu.memory_space<vmem>>) attributes {dimension_semantics = [#tpu.dimension_semantics<parallel>], iteration_bounds = array<i64: 1>, scalar_prefetch = 0 : i64, scratch_operands = 0 : i64, tpu.core_type = #tpu.core_type<tc>, window_params = [{transform_indices = @transform_0, window_bounds = array<i64: 128, 32>}, {pipeline_mode = #tpu.pipeline_mode<synchronous>, transform_indices = @transform_1, window_bounds = array<i64: 8, 32>}, {pipeline_mode = #tpu.pipeline_mode<synchronous>, transform_indices = @transform_2, window_bounds = array<i64: 8, 1>}, {transform_indices = @transform_3, window_bounds = array<i64: 8, 128>}, {transform_indices = @transform_4, window_bounds = array<i64: 2, 128>}, {transform_indices = @transform_5, window_bounds = array<i64: 2, 128>}, {transform_indices = @transform_6, window_bounds = array<i64: 8, 2>}]} {
    %c0 = arith.constant 0 : index
    %c0_0 = arith.constant 0 : index
    %0 = vector.load %arg1[%c0, %c0_0] : memref<128x32xf32, #tpu.memory_space<vmem>>, vector<128x32xf32>
    %c0_1 = arith.constant 0 : index
    %c0_2 = arith.constant 0 : index
    %1 = vector.load %arg2[%c0_1, %c0_2] : memref<8x32xf32, #tpu.memory_space<vmem>>, vector<8x32xf32>
    %cst = arith.constant dense<0.000000e+00> : vector<8x128xf32>
    %2 = tpu.matmul %1, %0, %cst {dimension_numbers = #tpu.dot_dimension_numbers<[1], [1], [0], [0], [0, 0, 1, 0], [], []>} : vector<8x32xf32>, vector<128x32xf32>, vector<8x128xf32> -> vector<8x128xf32>
    %c0_3 = arith.constant 0 : index
    %c0_4 = arith.constant 0 : index
    %3 = vector.load %arg3[%c0_3, %c0_4] : memref<8x1xf32, #tpu.memory_space<vmem>>, vector<8x1xf32>
    %4 = vector.broadcast %3 : vector<8x1xf32> to vector<8x128xf32>
    %5 = arith.addf %2, %4 : vector<8x128xf32>
    %6 = tpu.iota {dimensions = array<i32: 1>} : vector<1x128xi32>
    %c128_i32 = arith.constant 128 : i32
    %7 = arith.muli %arg0, %c128_i32 : i32
    %8 = vector.broadcast %7 : i32 to vector<1x128xi32>
    %9 = arith.addi %8, %6 : vector<1x128xi32>
    %c16_i32 = arith.constant 16 : i32
    %10 = vector.broadcast %c16_i32 : i32 to vector<1x128xi32>
    %11 = arith.cmpi slt, %9, %10 : vector<1x128xi32>
    %12 = arith.extui %11 : vector<1x128xi1> to vector<1x128xi32>
    %13 = arith.sitofp %12 : vector<1x128xi32> to vector<1x128xf32>
    %14 = arith.mulf %5, %5 : vector<8x128xf32>
    %15 = vector.broadcast %13 : vector<1x128xf32> to vector<8x128xf32>
    %16 = arith.mulf %14, %15 : vector<8x128xf32>
    %cst_5 = arith.constant dense<0.000000e+00> : vector<8xf32>
    %17 = vector.multi_reduction <add>, %16, %cst_5 [1] : vector<8x128xf32> to vector<8xf32>
    %18 = vector.shape_cast %17 : vector<8xf32> to vector<8x1xf32>
    %cst_6 = arith.constant dense<0.000000e+00> : vector<1xf32>
    %19 = vector.multi_reduction <add>, %18, %cst_6 [0] : vector<8x1xf32> to vector<1xf32>
    %20 = vector.shape_cast %19 : vector<1xf32> to vector<1x1xf32>
    %cst_7 = arith.constant dense<0xFF800000> : vector<128xf32>
    %21 = vector.multi_reduction <maximumf>, %5, %cst_7 [0] : vector<8x128xf32> to vector<128xf32>
    %22 = vector.shape_cast %21 : vector<128xf32> to vector<1x128xf32>
    %23 = vector.broadcast %22 : vector<1x128xf32> to vector<8x128xf32>
    %24 = arith.subf %5, %23 : vector<8x128xf32>
    %25 = math.exp %24 : vector<8x128xf32>
    %cst_8 = arith.constant dense<0.000000e+00> : vector<128xf32>
    %26 = vector.multi_reduction <add>, %25, %cst_8 [0] : vector<8x128xf32> to vector<128xf32>
    %27 = vector.shape_cast %26 : vector<128xf32> to vector<1x128xf32>
    %28 = tpu.reciprocal %27 : vector<1x128xf32> -> vector<1x128xf32>
    %29 = vector.broadcast %28 : vector<1x128xf32> to vector<8x128xf32>
    %30 = arith.mulf %25, %29 : vector<8x128xf32>
    %c0_9 = arith.constant 0 : index
    %c0_10 = arith.constant 0 : index
    %31 = vector.load %arg4[%c0_9, %c0_10] : memref<8x128xf32, #tpu.memory_space<vmem>>, vector<8x128xf32>
    tpu.vector_store %arg4[%c0_9, %c0_10], %30 {strides = array<i32>} : memref<8x128xf32, #tpu.memory_space<vmem>>, vector<8x128xf32>,
    %32 = tpu.iota {dimensions = array<i32: 0>} : vector<8x128xi32>
    %cst_11 = arith.constant 0.000000e+00 : f32
    %33 = vector.broadcast %cst_11 : f32 to vector<8x128xf32>
    %34 = vector.extract_strided_slice %30 {offsets = [0, 0], sizes = [1, 128], strides = [1, 1]} : vector<8x128xf32> to vector<1x128xf32>
    %c0_i32 = arith.constant 0 : i32
    %35 = vector.broadcast %c0_i32 : i32 to vector<1x128xi32>
    %36 = vector.extract_strided_slice %30 {offsets = [1, 0], sizes = [1, 128], strides = [1, 1]} : vector<8x128xf32> to vector<1x128xf32>
    %37 = arith.cmpf ogt, %36, %34 : vector<1x128xf32>
    %38 = arith.select %37, %36, %34 : vector<1x128xi1>, vector<1x128xf32>
    %c1_i32 = arith.constant 1 : i32
    %39 = vector.broadcast %c1_i32 : i32 to vector<1x128xi32>
    %40 = arith.select %37, %39, %35 : vector<1x128xi1>, vector<1x128xi32>
    %41 = vector.extract_strided_slice %30 {offsets = [2, 0], sizes = [1, 128], strides = [1, 1]} : vector<8x128xf32> to vector<1x128xf32>
    %42 = arith.cmpf ogt, %41, %38 : vector<1x128xf32>
    %43 = arith.select %42, %41, %38 : vector<1x128xi1>, vector<1x128xf32>
    %c2_i32 = arith.constant 2 : i32
    %44 = vector.broadcast %c2_i32 : i32 to vector<1x128xi32>
    %45 = arith.select %42, %44, %40 : vector<1x128xi1>, vector<1x128xi32>
    %46 = vector.extract_strided_slice %30 {offsets = [3, 0], sizes = [1, 128], strides = [1, 1]} : vector<8x128xf32> to vector<1x128xf32>
    %47 = arith.cmpf ogt, %46, %43 : vector<1x128xf32>
    %48 = arith.select %47, %46, %43 : vector<1x128xi1>, vector<1x128xf32>
    %c3_i32 = arith.constant 3 : i32
    %49 = vector.broadcast %c3_i32 : i32 to vector<1x128xi32>
    %50 = arith.select %47, %49, %45 : vector<1x128xi1>, vector<1x128xi32>
    %51 = vector.extract_strided_slice %30 {offsets = [4, 0], sizes = [1, 128], strides = [1, 1]} : vector<8x128xf32> to vector<1x128xf32>
    %52 = arith.cmpf ogt, %51, %48 : vector<1x128xf32>
    %53 = arith.select %52, %51, %48 : vector<1x128xi1>, vector<1x128xf32>
    %c4_i32 = arith.constant 4 : i32
    %54 = vector.broadcast %c4_i32 : i32 to vector<1x128xi32>
    %55 = arith.select %52, %54, %50 : vector<1x128xi1>, vector<1x128xi32>
    %56 = vector.extract_strided_slice %30 {offsets = [5, 0], sizes = [1, 128], strides = [1, 1]} : vector<8x128xf32> to vector<1x128xf32>
    %57 = arith.cmpf ogt, %56, %53 : vector<1x128xf32>
    %58 = arith.select %57, %56, %53 : vector<1x128xi1>, vector<1x128xf32>
    %c5_i32 = arith.constant 5 : i32
    %59 = vector.broadcast %c5_i32 : i32 to vector<1x128xi32>
    %60 = arith.select %57, %59, %55 : vector<1x128xi1>, vector<1x128xi32>
    %61 = vector.extract_strided_slice %30 {offsets = [6, 0], sizes = [1, 128], strides = [1, 1]} : vector<8x128xf32> to vector<1x128xf32>
    %62 = arith.cmpf ogt, %61, %58 : vector<1x128xf32>
    %63 = arith.select %62, %61, %58 : vector<1x128xi1>, vector<1x128xf32>
    %c6_i32 = arith.constant 6 : i32
    %64 = vector.broadcast %c6_i32 : i32 to vector<1x128xi32>
    %65 = arith.select %62, %64, %60 : vector<1x128xi1>, vector<1x128xi32>
    %66 = vector.extract_strided_slice %30 {offsets = [7, 0], sizes = [1, 128], strides = [1, 1]} : vector<8x128xf32> to vector<1x128xf32>
    %67 = arith.cmpf ogt, %66, %63 : vector<1x128xf32>
    %68 = arith.select %67, %66, %63 : vector<1x128xi1>, vector<1x128xf32>
    %c7_i32 = arith.constant 7 : i32
    %69 = vector.broadcast %c7_i32 : i32 to vector<1x128xi32>
    %70 = arith.select %67, %69, %65 : vector<1x128xi1>, vector<1x128xi32>
    %71 = vector.broadcast %70 : vector<1x128xi32> to vector<8x128xi32>
    %72 = arith.cmpi eq, %32, %71 : vector<8x128xi32>
    %73 = arith.extui %72 : vector<8x128xi1> to vector<8x128xi32>
    %74 = arith.sitofp %73 : vector<8x128xi32> to vector<8x128xf32>
    %75 = arith.addf %33, %74 : vector<8x128xf32>
    %cst_12 = arith.constant -1.000000e+00 : f32
    %76 = vector.broadcast %cst_12 : f32 to vector<8x128xf32>
    %77 = arith.select %72, %76, %30 : vector<8x128xi1>, vector<8x128xf32>
    %78 = vector.extract_strided_slice %77 {offsets = [0, 0], sizes = [1, 128], strides = [1, 1]} : vector<8x128xf32> to vector<1x128xf32>
    %c0_i32_13 = arith.constant 0 : i32
    %79 = vector.broadcast %c0_i32_13 : i32 to vector<1x128xi32>
    %80 = vector.extract_strided_slice %77 {offsets = [1, 0], sizes = [1, 128], strides = [1, 1]} : vector<8x128xf32> to vector<1x128xf32>
    %81 = arith.cmpf ogt, %80, %78 : vector<1x128xf32>
    %82 = arith.select %81, %80, %78 : vector<1x128xi1>, vector<1x128xf32>
    %c1_i32_14 = arith.constant 1 : i32
    %83 = vector.broadcast %c1_i32_14 : i32 to vector<1x128xi32>
    %84 = arith.select %81, %83, %79 : vector<1x128xi1>, vector<1x128xi32>
    %85 = vector.extract_strided_slice %77 {offsets = [2, 0], sizes = [1, 128], strides = [1, 1]} : vector<8x128xf32> to vector<1x128xf32>
    %86 = arith.cmpf ogt, %85, %82 : vector<1x128xf32>
    %87 = arith.select %86, %85, %82 : vector<1x128xi1>, vector<1x128xf32>
    %c2_i32_15 = arith.constant 2 : i32
    %88 = vector.broadcast %c2_i32_15 : i32 to vector<1x128xi32>
    %89 = arith.select %86, %88, %84 : vector<1x128xi1>, vector<1x128xi32>
    %90 = vector.extract_strided_slice %77 {offsets = [3, 0], sizes = [1, 128], strides = [1, 1]} : vector<8x128xf32> to vector<1x128xf32>
    %91 = arith.cmpf ogt, %90, %87 : vector<1x128xf32>
    %92 = arith.select %91, %90, %87 : vector<1x128xi1>, vector<1x128xf32>
    %c3_i32_16 = arith.constant 3 : i32
    %93 = vector.broadcast %c3_i32_16 : i32 to vector<1x128xi32>
    %94 = arith.select %91, %93, %89 : vector<1x128xi1>, vector<1x128xi32>
    %95 = vector.extract_strided_slice %77 {offsets = [4, 0], sizes = [1, 128], strides = [1, 1]} : vector<8x128xf32> to vector<1x128xf32>
    %96 = arith.cmpf ogt, %95, %92 : vector<1x128xf32>
    %97 = arith.select %96, %95, %92 : vector<1x128xi1>, vector<1x128xf32>
    %c4_i32_17 = arith.constant 4 : i32
    %98 = vector.broadcast %c4_i32_17 : i32 to vector<1x128xi32>
    %99 = arith.select %96, %98, %94 : vector<1x128xi1>, vector<1x128xi32>
    %100 = vector.extract_strided_slice %77 {offsets = [5, 0], sizes = [1, 128], strides = [1, 1]} : vector<8x128xf32> to vector<1x128xf32>
    %101 = arith.cmpf ogt, %100, %97 : vector<1x128xf32>
    %102 = arith.select %101, %100, %97 : vector<1x128xi1>, vector<1x128xf32>
    %c5_i32_18 = arith.constant 5 : i32
    %103 = vector.broadcast %c5_i32_18 : i32 to vector<1x128xi32>
    %104 = arith.select %101, %103, %99 : vector<1x128xi1>, vector<1x128xi32>
    %105 = vector.extract_strided_slice %77 {offsets = [6, 0], sizes = [1, 128], strides = [1, 1]} : vector<8x128xf32> to vector<1x128xf32>
    %106 = arith.cmpf ogt, %105, %102 : vector<1x128xf32>
    %107 = arith.select %106, %105, %102 : vector<1x128xi1>, vector<1x128xf32>
    %c6_i32_19 = arith.constant 6 : i32
    %108 = vector.broadcast %c6_i32_19 : i32 to vector<1x128xi32>
    %109 = arith.select %106, %108, %104 : vector<1x128xi1>, vector<1x128xi32>
    %110 = vector.extract_strided_slice %77 {offsets = [7, 0], sizes = [1, 128], strides = [1, 1]} : vector<8x128xf32> to vector<1x128xf32>
    %111 = arith.cmpf ogt, %110, %107 : vector<1x128xf32>
    %112 = arith.select %111, %110, %107 : vector<1x128xi1>, vector<1x128xf32>
    %c7_i32_20 = arith.constant 7 : i32
    %113 = vector.broadcast %c7_i32_20 : i32 to vector<1x128xi32>
    %114 = arith.select %111, %113, %109 : vector<1x128xi1>, vector<1x128xi32>
    %115 = vector.broadcast %114 : vector<1x128xi32> to vector<8x128xi32>
    %116 = arith.cmpi eq, %32, %115 : vector<8x128xi32>
    %117 = arith.extui %116 : vector<8x128xi1> to vector<8x128xi32>
    %118 = arith.sitofp %117 : vector<8x128xi32> to vector<8x128xf32>
    %119 = arith.addf %75, %118 : vector<8x128xf32>
    %120 = tpu.concatenate %68, %112 in 0 : vector<1x128xf32>, vector<1x128xf32> -> vector<2x128xf32>
    %c0_21 = arith.constant 0 : index
    %c0_22 = arith.constant 0 : index
    %121 = vector.load %arg5[%c0_21, %c0_22] : memref<2x128xf32, #tpu.memory_space<vmem>>, vector<2x128xf32>
    tpu.vector_store %arg5[%c0_21, %c0_22], %120 {strides = array<i32>} : memref<2x128xf32, #tpu.memory_space<vmem>>, vector<2x128xf32>,
    %122 = tpu.concatenate %70, %114 in 0 : vector<1x128xi32>, vector<1x128xi32> -> vector<2x128xi32>
    %c0_23 = arith.constant 0 : index
    %c0_24 = arith.constant 0 : index
    %123 = vector.load %arg6[%c0_23, %c0_24] : memref<2x128xi32, #tpu.memory_space<vmem>>, vector<2x128xi32>
    tpu.vector_store %arg6[%c0_23, %c0_24], %122 {strides = array<i32>} : memref<2x128xi32, #tpu.memory_space<vmem>>, vector<2x128xi32>,
    %124 = vector.broadcast %13 : vector<1x128xf32> to vector<8x128xf32>
    %125 = arith.mulf %119, %124 : vector<8x128xf32>
    %cst_25 = arith.constant dense<0.000000e+00> : vector<8xf32>
    %126 = vector.multi_reduction <add>, %125, %cst_25 [1] : vector<8x128xf32> to vector<8xf32>
    %127 = vector.shape_cast %126 : vector<8xf32> to vector<8x1xf32>
    %c0_26 = arith.constant 0 : index
    %c0_27 = arith.constant 0 : index
    %128 = vector.load %arg7[%c0_26, %c0_27] : memref<8x2xf32, #tpu.memory_space<vmem>>, vector<8x1xf32>
    tpu.vector_store %arg7[%c0_26, %c0_27], %127 {strides = array<i32>} : memref<8x2xf32, #tpu.memory_space<vmem>>, vector<8x1xf32>,
    %129 = tpu.iota {dimensions = array<i32: 0>} : vector<8x1xi32>
    %c0_i32_28 = arith.constant 0 : i32
    %130 = vector.broadcast %c0_i32_28 : i32 to vector<8x1xi32>
    %131 = arith.cmpi eq, %129, %130 : vector<8x1xi32>
    %cst_29 = arith.constant 0.000000e+00 : f32
    %132 = vector.shape_cast %20 : vector<1x1xf32> to vector<1x1xf32>
    %133 = vector.broadcast %132 : vector<1x1xf32> to vector<8x1xf32>
    %134 = vector.broadcast %cst_29 : f32 to vector<8x1xf32>
    %135 = arith.select %131, %133, %134 : vector<8x1xi1>, vector<8x1xf32>
    %c0_30 = arith.constant 0 : index
    %c1 = arith.constant 1 : index
    %136 = vector.load %arg7[%c0_30, %c1] : memref<8x2xf32, #tpu.memory_space<vmem>>, vector<8x1xf32>
    tpu.vector_store %arg7[%c0_30, %c1], %135 {strides = array<i32>} : memref<8x2xf32, #tpu.memory_space<vmem>>, vector<8x1xf32>,
    return
  }
  func.func @transform_0(%arg0: i32) -> (i32, i32) {
    %c0_i32 = arith.constant 0 : i32
    %c0_i32_0 = arith.constant 0 : i32
    return %arg0, %c0_i32 : i32, i32
  }
  func.func @transform_1(%arg0: i32) -> (i32, i32) {
    %c0_i32 = arith.constant 0 : i32
    %c0_i32_0 = arith.constant 0 : i32
    %c0_i32_1 = arith.constant 0 : i32
    return %c0_i32, %c0_i32_0 : i32, i32
  }
  func.func @transform_2(%arg0: i32) -> (i32, i32) {
    %c0_i32 = arith.constant 0 : i32
    %c0_i32_0 = arith.constant 0 : i32
    %c0_i32_1 = arith.constant 0 : i32
    return %c0_i32, %c0_i32_0 : i32, i32
  }
  func.func @transform_3(%arg0: i32) -> (i32, i32) {
    %c0_i32 = arith.constant 0 : i32
    %c0_i32_0 = arith.constant 0 : i32
    return %c0_i32, %arg0 : i32, i32
  }
  func.func @transform_4(%arg0: i32) -> (i32, i32) {
    %c0_i32 = arith.constant 0 : i32
    %c0_i32_0 = arith.constant 0 : i32
    return %c0_i32, %arg0 : i32, i32
  }
  func.func @transform_5(%arg0: i32) -> (i32, i32) {
    %c0_i32 = arith.constant 0 : i32
    %c0_i32_0 = arith.constant 0 : i32
    return %c0_i32, %arg0 : i32, i32
  }
  func.func @transform_6(%arg0: i32) -> (i32, i32) {
    %c0_i32 = arith.constant 0 : i32
    %c0_i32_0 = arith.constant 0 : i32
    return %arg0, %c0_i32 : i32, i32
  }
}

</mosaic_0001>

<llo_original>
// kernel: tpu_custom_call.1
$region0: #{tpu_custom_call.1}
  #allocation0 [shape = 'u32[]', space=smem, size = 0x4, offset = 0x4, fixed_abs, tag = 'smem constant byte address 0x4 - core index']
  #allocation1 [shape = 'u32[144,128]{1,0:T(1,128)}', space=vmem, size = 0x12000, scoped, tag = 'internal scratch']
  %s0 = inlined_call_operand.vmem [shape: f32[128,32], index: 0, kind: input, shape index: {}]
  %s1 = inlined_call_operand.vmem [shape: f32[8,32], index: 1, kind: input, shape index: {}]
  %s2 = inlined_call_operand.vmem [shape: f32[8,1], index: 2, kind: input, shape index: {}]
  %s3 = inlined_call_operand.hbm [shape: f32[8,128], index: 3, kind: output, shape index: {0}]
  %s4 = inlined_call_operand.hbm [shape: f32[2,128], index: 4, kind: output, shape index: {1}]
  %s5 = inlined_call_operand.hbm [shape: s32[2,128], index: 5, kind: output, shape index: {2}]
  %s6 = inlined_call_operand.vmem [shape: f32[8,2], index: 6, kind: output, shape index: {3}]
  %7 = xla_tuple %s3, %s4, %s5, %s6
  %s8 = sld [smem:[#allocation0]]
  $region46: #{tpu_custom_call.1} parent=0
    _
  %s10 = ssub.s32 1, %s8
  %s11 = scalar_select 0, %s10, %s8
  $region1: #{tpu_custom_call.1} parent=0
    #allocation2 [shape = 'u8[4096]{0}', space=vmem, size = 0x1000, scoped, tag = 'output window, operand 0, single buffered']
    #allocation3 [shape = 's32[1]{0}', space=sflag, size = 0x4, scoped, tag = 'scoped memory for tpu_custom_call.1']
    #allocation4 [shape = 'u8[1024]{0}', space=vmem, size = 0x400, scoped, tag = 'output window, operand 1, single buffered']
    #allocation5 [shape = 's32[1]{0}', space=sflag, size = 0x4, scoped, tag = 'scoped memory for tpu_custom_call.1']
    #allocation6 [shape = 'u8[1024]{0}', space=vmem, size = 0x400, scoped, tag = 'output window, operand 2, single buffered']
    %12 = vsyncpa [#allocation3], 0
    %13 = vsyncpa [#allocation5], 0
    // Predicated region
    $region2: #{tpu_custom_call.1} parent=1 // pred_check
      _
    $region3: #{tpu_custom_call.1} parent=1 // pred_check_branch
      %15 = sbr.rel (0) target = $region5
    $region4: #{tpu_custom_call.1} parent=1 // pred_region
      _
    $region5: #{tpu_custom_call.1} parent=1 // pred_fallthru
      _
    // Predicated region
    $region6: #{tpu_custom_call.1} parent=1 // pred_check
      _
    $region7: #{tpu_custom_call.1} parent=1 // pred_check_branch
      %17 = sbr.rel (0) target = $region9
    $region8: #{tpu_custom_call.1} parent=1 // pred_region
      _
    $region9: #{tpu_custom_call.1} parent=1 // pred_fallthru
      _
    // Predicated region
    $region10: #{tpu_custom_call.1} parent=1 // pred_check
      _
    $region11: #{tpu_custom_call.1} parent=1 // pred_check_branch
      %19 = sbr.rel (0) target = $region13
    $region12: #{tpu_custom_call.1} parent=1 // pred_region
      _
    $region13: #{tpu_custom_call.1} parent=1 // pred_fallthru
      _
    %v20 = vld [vmem:[%s0] sm:$0xff]
    %v21 = vld [vmem:[%s0 + $0x8] sm:$0xff]
    %v22 = vld [vmem:[%s0 + $0x10] sm:$0xff]
    %v23 = vld [vmem:[%s0 + $0x18] sm:$0xff]
    %v24 = vld [vmem:[%s0 + $0x20] sm:$0xff]
    %v25 = vld [vmem:[%s0 + $0x28] sm:$0xff]
    %v26 = vld [vmem:[%s0 + $0x30] sm:$0xff]
    %v27 = vld [vmem:[%s0 + $0x38] sm:$0xff]
    %v28 = vld [vmem:[%s0 + $0x40] sm:$0xff]
    %v29 = vld [vmem:[%s0 + $0x48] sm:$0xff]
    %v30 = vld [vmem:[%s0 + $0x50] sm:$0xff]
    %v31 = vld [vmem:[%s0 + $0x58] sm:$0xff]
    %v32 = vld [vmem:[%s0 + $0x60] sm:$0xff]
    %v33 = vld [vmem:[%s0 + $0x68] sm:$0xff]
    %v34 = vld [vmem:[%s0 + $0x70] sm:$0xff]
    %v35 = vld [vmem:[%s0 + $0x78] sm:$0xff]
    %v36 = vld [vmem:[%s1] sm:$0xff]
    %v37 = vld [vmem:[%s2] sm:$0xff]
    %39 = vset.pattern.permute.xlu0 0
    %40 = vperm.xlu0 %39, %v37
    %v41 = vpop.permute.xlu0 %40
    %vm43 = vcmask 261120
    %v45 = vsel %vm43, %v36, 0
    %v48 = vsel %vm43, %v20, 0
    %v51 = vsel %vm43, %v21, 0
    %v54 = vsel %vm43, %v22, 0
    %v57 = vsel %vm43, %v23, 0
    %v60 = vsel %vm43, %v24, 0
    %v63 = vsel %vm43, %v25, 0
    %v66 = vsel %vm43, %v26, 0
    %v69 = vsel %vm43, %v27, 0
    %v72 = vsel %vm43, %v28, 0
    %v75 = vsel %vm43, %v29, 0
    %v78 = vsel %vm43, %v30, 0
    %v81 = vsel %vm43, %v31, 0
    %v84 = vsel %vm43, %v32, 0
    %v87 = vsel %vm43, %v33, 0
    %v90 = vsel %vm43, %v34, 0
    %v93 = vsel %vm43, %v35, 0
    %95 = vmatprep.subr.mxu0 0.0
    %96 = vmatpush1.xpose.msra.mxu0 %v48
    %97 = vmatprep.subr.mxu0 0.0
    %98 = vmatpush1.xpose.msra.mxu0 %v51
    %99 = vmatprep.subr.mxu0 0.0
    %100 = vmatpush1.xpose.msra.mxu0 %v54
    %101 = vmatprep.subr.mxu0 0.0
    %102 = vmatpush1.xpose.msra.mxu0 %v57
    %103 = vmatprep.subr.mxu0 0.0
    %104 = vmatpush1.xpose.msra.mxu0 %v60
    %105 = vmatprep.subr.mxu0 0.0
    %106 = vmatpush1.xpose.msra.mxu0 %v63
    %107 = vmatprep.subr.mxu0 0.0
    %108 = vmatpush1.xpose.msra.mxu0 %v66
    %109 = vmatprep.subr.mxu0 0.0
    %110 = vmatpush1.xpose.msra.mxu0 %v69
    %111 = vmatprep.subr.mxu0 0.0
    %112 = vmatpush1.xpose.msra.mxu0 %v72
    %113 = vmatprep.subr.mxu0 0.0
    %114 = vmatpush1.xpose.msra.mxu0 %v75
    %115 = vmatprep.subr.mxu0 0.0
    %116 = vmatpush1.xpose.msra.mxu0 %v78
    %117 = vmatprep.subr.mxu0 0.0
    %118 = vmatpush1.xpose.msra.mxu0 %v81
    %119 = vmatprep.subr.mxu0 0.0
    %120 = vmatpush1.xpose.msra.mxu0 %v84
    %121 = vmatprep.subr.mxu0 0.0
    %122 = vmatpush1.xpose.msra.mxu0 %v87
    %123 = vmatprep.subr.mxu0 0.0
    %124 = vmatpush1.xpose.msra.mxu0 %v90
    %125 = vmatprep.subr.mxu0 0.0
    %126 = vmatpush1.xpose.msra.mxu0 %v93
    %127 = vmatprep.subr.mxu0 0.0
    %128 = vmatpush1.xpose.msra.mxu0 0.0
    %129 = vmatprep.subr.mxu0 0.0
    %130 = vmatpush1.xpose.msra.mxu0 0.0
    %131 = vmatprep.subr.mxu0 0.0
    %132 = vmatpush1.xpose.msra.mxu0 0.0
    %133 = vmatprep.subr.mxu0 0.0
    %134 = vmatpush1.xpose.msra.mxu0 0.0
    %135 = vmatprep.subr.mxu0 0.0
    %136 = vmatpush1.xpose.msra.mxu0 0.0
    %137 = vmatprep.subr.mxu0 0.0
    %138 = vmatpush1.xpose.msra.mxu0 0.0
    %139 = vmatprep.subr.mxu0 0.0
    %140 = vmatpush1.xpose.msra.mxu0 0.0
    %141 = vmatprep.subr.mxu0 0.0
    %142 = vmatpush1.xpose.msra.mxu0 0.0
    %143 = vmatprep.subr.mxu0 0.0
    %144 = vmatpush1.xpose.msra.mxu0 0.0
    %145 = vmatprep.subr.mxu0 0.0
    %146 = vmatpush1.xpose.msra.mxu0 0.0
    %147 = vmatprep.subr.mxu0 0.0
    %148 = vmatpush1.xpose.msra.mxu0 0.0
    %149 = vmatprep.subr.mxu0 0.0
    %150 = vmatpush1.xpose.msra.mxu0 0.0
    %151 = vmatprep.subr.mxu0 0.0
    %152 = vmatpush1.xpose.msra.mxu0 0.0
    %153 = vmatprep.subr.mxu0 0.0
    %154 = vmatpush1.xpose.msra.mxu0 0.0
    %155 = vmatprep.subr.mxu0 0.0
    %156 = vmatpush1.xpose.msra.mxu0 0.0
    %157 = vmatprep.subr.mxu0 0.0
    %158 = vmatpush1.xpose.msra.mxu0 0.0
    %159 = vmatprep.mubr.f32.mxu0 0.0
    %160 = vmatmul.mubr.f32.gmra.mrb[0].mxu0 %v45
    %v161 = vpop.f32.mrb[0].mxu0
    %v162 = vadd.f32 %v41, %v161
    %v163 = vpop.f32.mrb[0].mxu0
    %164 = vdwg.mxu0
    %v165 = vlaneseq
    %v166 = vand.u32 %v165, 127
    %s167 = smul.u32 0, 128
    %v168 = vstv %s167
    %v169 = vadd.s32 %v168, %v166
    %vm170 = vcmp.lt.s32.totalorder %v169, 16
    %v171 = vsel %vm170, 1, 0
    %v172 = vcvt.s32.f32 %v171
    %v173 = vmul.f32 %v162, %v162
    %v174 = vmul.f32 %v173, %v172
    %175 = vadd.xlane.f32.xlu0 %v174
    %v176 = vpop.xlane.xlu0 %175
    %v177 = vrot.slane %v176, 4
    %v178 = vadd.f32 %v176, %v177
    %v179 = vrot.slane %v178, 2
    %v180 = vadd.f32 %v178, %v179
    %v181 = vrot.slane %v180, 1
    %v182 = vadd.f32 %v180, %v181
    %v183 = vrot.slane %v162, 4
    %v184 = vmax.f32 %v162, %v183
    %v185 = vrot.slane %v184, 2
    %v186 = vmax.f32 %v184, %v185
    %v187 = vrot.slane %v186, 1
    %v188 = vmax.f32 %v186, %v187
    %v189 = vsub.f32 %v162, %v188
    %v190 = vmul.f32 %v189, 1.442695
    %v191 = vpow.pop %v190
    %v192 = vrot.slane %v191, 4
    %v193 = vadd.f32 %v191, %v192
    %v194 = vrot.slane %v193, 2
    %v195 = vadd.f32 %v193, %v194
    %v196 = vrot.slane %v195, 1
    %v197 = vadd.f32 %v195, %v196
    %v198 = vrcp.pop %v197
    %v199 = vmul.f32 %v191, %v198
    %200 = vst [vmem:[#allocation2] sm:$0xff] %v199
    %v201 = vlaneseq
    %v202 = vshrl.u32 %v201, 7
    %v204 = vrot.slane %v199, 7
    %vm206 = vcmp.gt.f32.partialorder %v199, %v204
    %v207 = vsel %vm206, %v199, %v204
    %v208 = vsel %vm206, 1, 0
    %v210 = vrot.slane %v207, 7
    %vm212 = vcmp.gt.f32.partialorder %v199, %v210
    %v213 = vsel %vm212, %v199, %v210
    %v214 = vrot.slane %v208, 7
    %v215 = vsel %vm212, 2, %v214
    %v217 = vrot.slane %v213, 7
    %vm219 = vcmp.gt.f32.partialorder %v199, %v217
    %v220 = vsel %vm219, %v199, %v217
    %v221 = vrot.slane %v215, 7
    %v222 = vsel %vm219, 3, %v221
    %v224 = vrot.slane %v220, 7
    %vm226 = vcmp.gt.f32.partialorder %v199, %v224
    %v227 = vsel %vm226, %v199, %v224
    %v228 = vrot.slane %v222, 7
    %v229 = vsel %vm226, 4, %v228
    %v231 = vrot.slane %v227, 7
    %vm233 = vcmp.gt.f32.partialorder %v199, %v231
    %v234 = vsel %vm233, %v199, %v231
    %v235 = vrot.slane %v229, 7
    %v236 = vsel %vm233, 5, %v235
    %v238 = vrot.slane %v234, 7
    %vm240 = vcmp.gt.f32.partialorder %v199, %v238
    %v241 = vsel %vm240, %v199, %v238
    %v242 = vrot.slane %v236, 7
    %v243 = vsel %vm240, 6, %v242
    %v245 = vrot.slane %v241, 7
    %vm247 = vcmp.gt.f32.partialorder %v199, %v245
    %v248 = vsel %vm247, %v199, %v245
    %v249 = vrot.slane %v243, 7
    %v250 = vsel %vm247, 7, %v249
    %v251 = vlaneseq
    %v252 = vshrl.u32 %v251, 7
    %v253 = vsub.s32 7, %v252
    %v254 = vrot.slane %v250, %v253
    %vm255 = vcmp.eq.s32.totalorder %v202, %v254
    %v256 = vsel %vm255, 1, 0
    %v257 = vcvt.s32.f32 %v256
    %v258 = vadd.f32 %v257, 0.0
    %v259 = vsel %vm255, -1.0, %v199
    %v261 = vrot.slane %v259, 7
    %vm263 = vcmp.gt.f32.partialorder %v259, %v261
    %v264 = vsel %vm263, %v259, %v261
    %v265 = vsel %vm263, 1, 0
    %v267 = vrot.slane %v264, 7
    %vm269 = vcmp.gt.f32.partialorder %v259, %v267
    %v270 = vsel %vm269, %v259, %v267
    %v271 = vrot.slane %v265, 7
    %v272 = vsel %vm269, 2, %v271
    %v274 = vrot.slane %v270, 7
    %vm276 = vcmp.gt.f32.partialorder %v259, %v274
    %v277 = vsel %vm276, %v259, %v274
    %v278 = vrot.slane %v272, 7
    %v279 = vsel %vm276, 3, %v278
    %v281 = vrot.slane %v277, 7
    %vm283 = vcmp.gt.f32.partialorder %v259, %v281
    %v284 = vsel %vm283, %v259, %v281
    %v285 = vrot.slane %v279, 7
    %v286 = vsel %vm283, 4, %v285
    %v288 = vrot.slane %v284, 7
    %vm290 = vcmp.gt.f32.partialorder %v259, %v288
    %v291 = vsel %vm290, %v259, %v288
    %v292 = vrot.slane %v286, 7
    %v293 = vsel %vm290, 5, %v292
    %v295 = vrot.slane %v291, 7
    %vm297 = vcmp.gt.f32.partialorder %v259, %v295
    %v298 = vsel %vm297, %v259, %v295
    %v299 = vrot.slane %v293, 7
    %v300 = vsel %vm297, 6, %v299
    %v302 = vrot.slane %v298, 7
    %vm304 = vcmp.gt.f32.partialorder %v259, %v302
    %v305 = vsel %vm304, %v259, %v302
    %v306 = vrot.slane %v300, 7
    %v307 = vsel %vm304, 7, %v306
    %v308 = vlaneseq
    %v309 = vshrl.u32 %v308, 7
    %v310 = vsub.s32 7, %v309
    %v311 = vrot.slane %v307, %v310
    %vm312 = vcmp.eq.s32.totalorder %v202, %v311
    %v313 = vsel %vm312, 1, 0
    %v314 = vcvt.s32.f32 %v313
    %v315 = vadd.f32 %v258, %v314
    %v317 = vrot.slane %v248, 7
    %v320 = vrot.slane %v305, 6
    %vm322 = vcmask 1040384
    %v323 = vsel %vm322, %v317, %v320
    %324 = vst [vmem:[#allocation4] sm:$0x3] %v323
    %v325 = vrot.slane %v250, 7
    %v326 = vrot.slane %v307, 6
    %v327 = vsel %vm322, %v325, %v326
    %328 = vst [vmem:[#allocation6] sm:$0x3] %v327
    %v329 = vmul.f32 %v315, %v172
    %330 = vadd.xlane.f32.xlu0 %v329
    %v331 = vpop.xlane.xlu0 %330
    %vm332 = vcmask 7168
    %333 = vst.msk [vmem:[%s6] sm:$0xff] %vm332, %v331
    %vm334 = vcmp.eq.s32.totalorder %v202, 0
    %v335 = vsel %vm334, %v182, 0.0
    %vm336 = vcmask 15368
    %337 = vst.msk [vmem:[%s6] sm:$0xff] %vm336, %v335
    // Predicated region
    $region14: #{tpu_custom_call.1} parent=1 // pred_check
      _
    $region15: #{tpu_custom_call.1} parent=1 // pred_check_branch
      %339 = sbr.rel (0) target = $region17
    $region16: #{tpu_custom_call.1} parent=1 // pred_region
      %s341 = ssub.s32 128, 128
      %342 = vsyncadd [#allocation3], %s341
      %s344 = sshll.u32 [#allocation2], 4
      %s345 = int_to_ptr.vmem [resolvable:$true] %s344
      %347 = dma.vmem_to_hbm [thread:$0]  %s345, 128, %s3, [#allocation3]
    $region17: #{tpu_custom_call.1} parent=1 // pred_fallthru
      _
    // Predicated region
    $region18: #{tpu_custom_call.1} parent=1 // pred_check
      _
    $region19: #{tpu_custom_call.1} parent=1 // pred_check_branch
      %349 = sbr.rel (0) target = $region21
    $region20: #{tpu_custom_call.1} parent=1 // pred_region
      %s351 = ssub.s32 32, 32
      %352 = vsyncadd [#allocation5], %s351
      %s354 = sshll.u32 [#allocation4], 4
      %s355 = int_to_ptr.vmem [resolvable:$true] %s354
      %357 = dma.vmem_to_hbm [thread:$0]  %s355, 32, %s4, [#allocation5]
    $region21: #{tpu_custom_call.1} parent=1 // pred_fallthru
      _
    // Predicated region
    $region22: #{tpu_custom_call.1} parent=1 // pred_check
      _
    $region23: #{tpu_custom_call.1} parent=1 // pred_check_branch
      %359 = sbr.rel (0) target = $region25
    $region24: #{tpu_custom_call.1} parent=1 // pred_region
      %s361 = ssub.s32 32, 32
      %362 = vsyncadd [#allocation5], %s361
      %s364 = sshll.u32 [#allocation6], 4
      %s365 = int_to_ptr.vmem [resolvable:$true] %s364
      %367 = dma.vmem_to_hbm [thread:$0]  %s365, 32, %s5, [#allocation5]
    $region25: #{tpu_custom_call.1} parent=1 // pred_fallthru
      _
    // Predicated region
    $region26: #{tpu_custom_call.1} parent=1 // pred_check
      _
    $region27: #{tpu_custom_call.1} parent=1 // pred_check_branch
      %369 = sbr.rel (0) target = $region29
    $region28: #{tpu_custom_call.1} parent=1 // pred_region
      _
    $region29: #{tpu_custom_call.1} parent=1 // pred_fallthru
      _
    // Predicated region
    $region30: #{tpu_custom_call.1} parent=1 // pred_check
      _
    $region31: #{tpu_custom_call.1} parent=1 // pred_check_branch
      %371 = sbr.rel (0) target = $region33
    $region32: #{tpu_custom_call.1} parent=1 // pred_region
      %372 = dma.done [#allocation3], 128
    $region33: #{tpu_custom_call.1} parent=1 // pred_fallthru
      _
    // Predicated region
    $region34: #{tpu_custom_call.1} parent=1 // pred_check
      _
    $region35: #{tpu_custom_call.1} parent=1 // pred_check_branch
      %374 = sbr.rel (0) target = $region37
    $region36: #{tpu_custom_call.1} parent=1 // pred_region
      %375 = dma.done [#allocation5], 32
    $region37: #{tpu_custom_call.1} parent=1 // pred_fallthru
      _
    // Predicated region
    $region38: #{tpu_custom_call.1} parent=1 // pred_check
      _
    $region39: #{tpu_custom_call.1} parent=1 // pred_check_branch
      %377 = sbr.rel (0) target = $region41
    $region40: #{tpu_custom_call.1} parent=1 // pred_region
      %378 = dma.done [#allocation5], 32
    $region41: #{tpu_custom_call.1} parent=1 // pred_fallthru
      _
    // Predicated region
    $region42: #{tpu_custom_call.1} parent=1 // pred_check
      _
    $region43: #{tpu_custom_call.1} parent=1 // pred_check_branch
      %380 = sbr.rel (0) target = $region45
    $region44: #{tpu_custom_call.1} parent=1 // pred_region
      _
    $region45: #{tpu_custom_call.1} parent=1 // pred_fallthru
      _
    %381 = vsyncpa [#allocation3], 1
    %382 = vsyncpa [#allocation5], 1

</llo_original>
